<compile_context>
chip_gen: v6e
topology: v6e:2x2x1
jax: 0.10.0
libtpu: 0.0.40
codegen_flags: <defaults>
</compile_context>

<pallas_src>
from functools import partial

import jax
import jax.numpy as jnp
from jax import lax
from jax.experimental import pallas as pl
from jax.experimental.pallas import tpu as pltpu


def _round_up(v, m):
    return ((v + m - 1) // m) * m


def _cdiv(a, b):
    return -(-a // b)


# --------------------------------------------------------------------------------------
# Kernel 1: weight standardization (per output channel, unbiased=False). Tiny; one step.
# --------------------------------------------------------------------------------------
def _ws_kernel(w_ref, o_ref, *, eps):
    # w_ref / o_ref: (C_out, C_in * 9)
    w = w_ref[...].astype(jnp.float32)
    inv_n = 1.0 / w.shape[1]
    mean = jnp.sum(w, axis=1, keepdims=True) * inv_n
    var = jnp.sum(w * w, axis=1, keepdims=True) * inv_n - mean * mean
    o_ref[...] = ((w - mean) * lax.rsqrt(var + eps)).astype(o_ref.dtype)


# --------------------------------------------------------------------------------------
# Kernel 2: tiled 3x3 conv (padding=1) + fused GroupNorm partial statistics.
#   grid = (N, n_cout_tiles, n_spatial_tiles), spatial axis innermost ("arbitrary").
# --------------------------------------------------------------------------------------
def _conv3x3_kernel(xm_ref, xh_ref, w_ref, b_ref, m_ref,
                    y_ref, s1_ref, s2_ref, win_ref, stk_ref, *, C_in, TL, offs):
    # xm_ref : (1, C_in, TL)        main block of the haloed flat input (x_ext)
    # xh_ref : (1, 1, C_in, HP2)    head of the next chunk (supplies the stencil halo)
    # w_ref  : (TC, 9*C_in)         tap-stacked standardized weights
    # b_ref  : (TC, 1)              conv bias (f32)
    # m_ref  : (1, TL)              1.0 on valid output positions, 0.0 on border/tail
    # y_ref  : (1, TC, TL)          conv output tile
    # s1/s2  : (1, TC, 1)           per-channel sum / sum-of-squares accumulators (f32)
    # win_ref: (C_in, TL+HP2) scratch, stk_ref: (9*C_in, TL) scratch
    t = pl.program_id(2)

    @pl.when(t == 0)
    def _():
        s1_ref[...] = jnp.zeros_like(s1_ref)
        s2_ref[...] = jnp.zeros_like(s2_ref)

    # Assemble the haloed window for this tile: [main block | next-chunk head].
    win_ref[:, 0:TL] = xm_ref[0]
    win_ref[:, TL:] = xh_ref[0, 0]

    # Stack the 9 shifted taps along the contraction dim -> one MXU matmul (K = 9*C_in).
    for k, o in enumerate(offs):           # static unrolled; o are static lane offsets
        stk_ref[k * C_in:(k + 1) * C_in, :] = win_ref[:, o:o + TL]

    acc = jnp.dot(w_ref[...], stk_ref[...], preferred_element_type=jnp.float32)
    z = acc + b_ref[...]                   # (TC, TL) f32
    y_ref[0] = z.astype(y_ref.dtype)

    # GroupNorm partial stats fused into the conv epilogue (rides under the MXU).
    zm = z * m_ref[...]                    # zero out padded-border / tail positions
    s1_ref[0] = s1_ref[0] + jnp.sum(zm, axis=1, keepdims=True)
    s2_ref[0] = s2_ref[0] + jnp.sum(zm * zm, axis=1, keepdims=True)


# --------------------------------------------------------------------------------------
# Kernel 3: fused normalize + GN affine + optional scale_shift + SiLU (all folded into
# per-channel A, B in the wrapper). Fully parallel, large lane-dense tiles.
# --------------------------------------------------------------------------------------
def _norm_act_kernel(y_ref, a_ref, b_ref, o_ref):
    z = y_ref[0].astype(jnp.float32) * a_ref[0] + b_ref[0]     # (C_out, T2)
    o_ref[0] = (z * jax.nn.sigmoid(z)).astype(o_ref.dtype)


# --------------------------------------------------------------------------------------
# Tile pickers (VMEM-bounded; re-derived per call so they work on v5e/v6e/v7x).
# --------------------------------------------------------------------------------------
def _pick_cout_tile(C_out, max_tile):
    cap = max(1, min(C_out, max_tile))
    for tc in range(cap, 0, -1):
        if C_out % tc == 0 and (tc % 8 == 0 or tc == C_out):
            return tc
    return C_out


def _pick_spatial_tile(L, Wp, C_in, TC, in_bytes, out_bytes, max_tile):
    h = Wp + 1
    tl = min(4 * 1024 * 1024 // (9 * C_in * in_bytes),   # stacked-operand scratch
             2 * 1024 * 1024 // (C_in * in_bytes),        # input tile (double buffered)
             2 * 1024 * 1024 // (TC * out_bytes))         # output tile (double buffered)
    tl = max(tl, 2 * h)                                    # keep halo duplication bounded
    tl = max(128, (tl // 128) * 128)
    if max_tile is not None:
        tl = min(tl, max(128, (max_tile // 128) * 128))
    tl = min(tl, _round_up(L, 128))
    return max(tl, 128)


# --------------------------------------------------------------------------------------
# Wrapper: full Block forward.
# --------------------------------------------------------------------------------------
def block_forward(x, conv_w, conv_b, gn_weight, gn_bias, *, groups=8,
                  scale_shift=None, gn_eps=1e-5,
                  max_spatial_tile=None, max_cout_tile=256, compute_dtype=None):
    N, C_in, H, W = x.shape
    C_out = conv_w.shape[0]
    assert conv_w.shape == (C_out, C_in, 3, 3)
    assert C_out % groups == 0
    G, Cg = groups, C_out // groups
    ws_eps = 1e-5 if x.dtype == jnp.float32 else 1e-3     # matches WeightStandardizedConv2d

    cd = compute_dtype
    if cd is None:
        cd = jnp.bfloat16 if x.dtype == jnp.bfloat16 else jnp.float32
    cd = jnp.dtype(cd)
    out_dtype = x.dtype
    in_b = cd.itemsize
    out_b = jnp.dtype(out_dtype).itemsize

    # ---- 1. weight standardization (tiny; not worth further tuning) -------------------
    w2 = conv_w.reshape(C_out, C_in * 9).astype(jnp.float32)
    w_std = pl.pallas_call(
        partial(_ws_kernel, eps=ws_eps),
        out_shape=jax.ShapeDtypeStruct((C_out, C_in * 9), jnp.float32),
        grid_spec=pltpu.PrefetchScalarGridSpec(
            num_scalar_prefetch=0, grid=(1,),
            in_specs=[pl.BlockSpec((C_out, C_in * 9), lambda i: (0, 0))],
            out_specs=pl.BlockSpec((C_out, C_in * 9), lambda i: (0, 0))),
        compiler_params=pltpu.CompilerParams(dimension_semantics=("arbitrary",)),
    )(w2)
    # tap-major stacked weights: column block k = dh*3+dw holds w[:, :, dh, dw]
    w_mat = (w_std.reshape(C_out, C_in, 3, 3).transpose(0, 2, 3, 1)
             .reshape(C_out, 9 * C_in).astype(cd))
    bias2 = conv_b.reshape(C_out, 1).astype(jnp.float32)

    # ---- 2. geometry / tiling ----------------------------------------------------------
    Hp, Wp = H + 2, W + 2
    L = Hp * Wp                      # flat padded-spatial length
    h = Wp + 1                       # max backward stencil reach on the flat layout
    HP2 = _round_up(2 * h, 128)      # lane-padded halo width
    TC = _pick_cout_tile(C_out, max_cout_tile)
    TL = _pick_spatial_tile(L, Wp, C_in, TC, in_b, out_b, max_spatial_tile)
    n_t = _cdiv(L, TL)
    L_pad = n_t * TL
    n_co = C_out // TC

    # haloed flat input: h leading zeros, tail zeros; conv output p reads x_ext[p + off_k]
    xf = jnp.pad(x, ((0, 0), (0, 0), (1, 1), (1, 1))).reshape(N, C_in, L)
    x_ext = jnp.pad(xf, ((0, 0), (0, 0), (h, L_pad + HP2 - h - L))).astype(cd)
    # per-tile halo "heads": columns [(t+1)*TL, (t+1)*TL + HP2) of x_ext  (tiny duplication)
    idx = ((jnp.arange(n_t, dtype=jnp.int32) + 1)[:, None] * TL
           + jnp.arange(HP2, dtype=jnp.int32)[None, :])
    heads = jnp.take(x_ext, idx, axis=2).transpose(0, 2, 1, 3)   # (N, n_t, C_in, HP2)
    # validity mask over the padded-flat layout (1 = real output position)
    mask = jnp.pad(jnp.pad(jnp.ones((H, W), jnp.float32), ((1, 1), (1, 1))).reshape(1, L),
                   ((0, 0), (0, L_pad - L)))

    offs = tuple(h + (dh - 1) * Wp + (dw - 1) for dh in range(3) for dw in range(3))

    conv_flops = 2 * N * C_out * 9 * C_in * L_pad
    conv_bytes = ((x_ext.size + heads.size) * in_b * n_co
                  + N * C_out * L_pad * out_b + C_out * 9 * C_in * in_b)

    y, s1, s2 = pl.pallas_call(
        partial(_conv3x3_kernel, C_in=C_in, TL=TL, offs=offs),
        out_shape=(jax.ShapeDtypeStruct((N, C_out, L_pad), out_dtype),
                   jax.ShapeDtypeStruct((N, C_out, 1), jnp.float32),
                   jax.ShapeDtypeStruct((N, C_out, 1), jnp.float32)),
        grid_spec=pltpu.PrefetchScalarGridSpec(
            num_scalar_prefetch=0, grid=(N, n_co, n_t),
            in_specs=[
                pl.BlockSpec((1, C_in, TL), lambda n, c, t: (n, 0, t)),
                pl.BlockSpec((1, 1, C_in, HP2), lambda n, c, t: (n, t, 0, 0)),
                pl.BlockSpec((TC, 9 * C_in), lambda n, c, t: (c, 0)),
                pl.BlockSpec((TC, 1), lambda n, c, t: (c, 0)),
                pl.BlockSpec((1, TL), lambda n, c, t: (0, t)),
            ],
            out_specs=(
                pl.BlockSpec((1, TC, TL), lambda n, c, t: (n, c, t)),
                pl.BlockSpec((1, TC, 1), lambda n, c, t: (n, c, 0)),
                pl.BlockSpec((1, TC, 1), lambda n, c, t: (n, c, 0)),
            ),
            scratch_shapes=[pltpu.VMEM((C_in, TL + HP2), cd),
                            pltpu.VMEM((9 * C_in, TL), cd)]),
        compiler_params=pltpu.CompilerParams(
            dimension_semantics=("parallel", "parallel", "arbitrary"),
            vmem_limit_bytes=40 * 1024 * 1024),
        cost_estimate=pl.CostEstimate(flops=int(conv_flops), transcendentals=0,
                                      bytes_accessed=int(conv_bytes)),
    )(x_ext, heads, w_mat, bias2, mask)

    # ---- 3. finalize GroupNorm stats + fold all affine terms into per-channel A, B ----
    # (tiny (N, C_out)-sized math; done in plain JAX)
    count = float(Cg * H * W)
    s1g = s1.reshape(N, G, Cg).sum(axis=2)
    s2g = s2.reshape(N, G, Cg).sum(axis=2)
    mean = s1g / count
    var = jnp.maximum(s2g / count - mean * mean, 0.0)
    rstd = lax.rsqrt(var + gn_eps)
    gamma = gn_weight.reshape(G, Cg).astype(jnp.float32)
    beta = gn_bias.reshape(G, Cg).astype(jnp.float32)
    a = rstd[:, :, None] * gamma[None]                      # (N, G, Cg)
    b = beta[None] - mean[:, :, None] * a
    if scale_shift is not None:
        scale, shift = scale_shift
        sc = scale.reshape(N, G, Cg).astype(jnp.float32)
        sh = shift.reshape(N, G, Cg).astype(jnp.float32)
        a = a * (sc + 1.0)
        b = b * (sc + 1.0) + sh
    A = a.reshape(N, C_out, 1)
    B = b.reshape(N, C_out, 1)

    # ---- 4. normalize + SiLU pass: all channels per step, merged lane tiles >= ~MBs ---
    m_merge = 1
    for m in range(1, n_t + 1):
        if n_t % m == 0 and C_out * TL * m * out_b <= 4 * 1024 * 1024:
            m_merge = m
    T2 = TL * m_merge
    n_t2 = n_t // m_merge

    out_pad = pl.pallas_call(
        _norm_act_kernel,
        out_shape=jax.ShapeDtypeStruct((N, C_out, L_pad), out_dtype),
        grid_spec=pltpu.PrefetchScalarGridSpec(
            num_scalar_prefetch=0, grid=(N, n_t2),
            in_specs=[
                pl.BlockSpec((1, C_out, T2), lambda n, t: (n, 0, t)),
                pl.BlockSpec((1, C_out, 1), lambda n, t: (n, 0, 0)),
                pl.BlockSpec((1, C_out, 1), lambda n, t: (n, 0, 0)),
            ],
            out_specs=pl.BlockSpec((1, C_out, T2), lambda n, t: (n, 0, t))),
        compiler_params=pltpu.CompilerParams(
            dimension_semantics=("parallel", "parallel"),
            vmem_limit_bytes=32 * 1024 * 1024),
        cost_estimate=pl.CostEstimate(
            flops=int(6 * N * C_out * L_pad),
            transcendentals=int(N * C_out * L_pad),
            bytes_accessed=int(2 * N * C_out * L_pad * out_b)),
    )(y, A, B)

    # Final interior extraction (single strided XLA copy of the padded layout).
    out = out_pad[:, :, :L].reshape(N, C_out, Hp, Wp)[:, :, 1:H + 1, 1:W + 1]
    return out


# --------------------------------------------------------------------------------------
# Pure-JAX reference for validation.
# --------------------------------------------------------------------------------------
def _reference_block(x, conv_w, conv_b, gn_w, gn_b, groups, scale_shift=None, gn_eps=1e-5):
    ws_eps = 1e-5 if x.dtype == jnp.float32 else 1e-3
    wf = conv_w.astype(jnp.float32)
    mean = jnp.mean(wf, axis=(1, 2, 3), keepdims=True)
    var = jnp.mean((wf - mean) ** 2, axis=(1, 2, 3), keepdims=True)
    wn = (wf - mean) * lax.rsqrt(var + ws_eps)
    y = lax.conv_general_dilated(
        x.astype(jnp.float32), wn, window_strides=(1, 1), padding=((1, 1), (1, 1)),
        dimension_numbers=("NCHW", "OIHW", "NCHW"),
        precision=lax.Precision.HIGHEST) + conv_b.reshape(1, -1, 1, 1)
    N, C, H, W = y.shape
    yg = y.reshape(N, groups, -1)
    m = jnp.mean(yg, axis=2, keepdims=True)
    v = jnp.mean((yg - m) ** 2, axis=2, keepdims=True)
    yn = ((yg - m) * lax.rsqrt(v + gn_eps)).reshape(N, C, H, W)
    z = yn * gn_w.reshape(1, -1, 1, 1) + gn_b.reshape(1, -1, 1, 1)
    if scale_shift is not None:
        sc, sh = scale_shift
        z = z * (sc + 1.0) + sh
    return (z * jax.nn.sigmoid(z)).astype(x.dtype)


if __name__ == "__main__":
    key = jax.random.PRNGKey(0)
    k1, k2, k3, k4, k5, k6, k7 = jax.random.split(key, 7)

    N, dim, dim_out, groups, H, W = 2, 8, 16, 4, 16, 16
    x = jax.random.normal(k1, (N, dim, H, W), dtype=jnp.float32)
    conv_w = jax.random.normal(k2, (dim_out, dim, 3, 3), dtype=jnp.float32) * 0.2
    conv_b = jax.random.normal(k3, (dim_out,), dtype=jnp.float32) * 0.1
    gn_w = 1.0 + 0.1 * jax.random.normal(k6, (dim_out,), dtype=jnp.float32)
    gn_b = 0.1 * jax.random.normal(k7, (dim_out,), dtype=jnp.float32)
    scale = jax.random.normal(k4, (N, dim_out, 1, 1), dtype=jnp.float32) * 0.1
    shift = jax.random.normal(k5, (N, dim_out, 1, 1), dtype=jnp.float32) * 0.1

    # default tiling (single spatial tile) ...
    out1 = block_forward(x, conv_w, conv_b, gn_w, gn_b, groups=groups, scale_shift=None)
    # ... and forced small tiles: exercises multi-tile stats accumulation, halo stitching
    # across non-row-aligned tile boundaries, and C_out tiling, plus scale_shift.
    out2 = block_forward(x, conv_w, conv_b, gn_w, gn_b, groups=groups,
                         scale_shift=(scale, shift),
                         max_spatial_tile=128, max_cout_tile=8)
    jax.block_until_ready((out1, out2))

    ref1 = _reference_block(x, conv_w, conv_b, gn_w, gn_b, groups, None)
    ref2 = _reference_block(x, conv_w, conv_b, gn_w, gn_b, groups, (scale, shift))

    assert out1.shape == (N, dim_out, H, W)
    assert out2.shape == (N, dim_out, H, W)
    assert jnp.allclose(out1, ref1, atol=2e-3, rtol=2e-3)
    assert jnp.allclose(out2, ref2, atol=2e-3, rtol=2e-3)

    print("KERNEL_OK")
</pallas_src>

<mosaic_0001>
module attributes {stable_mosaic.version = 11 : i64} {
  func.func @_ws_kernel(%arg0: i32, %arg1: memref<16x72xf32, #tpu.memory_space<vmem>>, %arg2: memref<16x72xf32, #tpu.memory_space<vmem>>) attributes {dimension_semantics = [#tpu.dimension_semantics<arbitrary>], iteration_bounds = array<i64: 1>, scalar_prefetch = 0 : i64, scratch_operands = 0 : i64, tpu.core_type = #tpu.core_type<tc>, window_params = [{pipeline_mode = #tpu.pipeline_mode<synchronous>, transform_indices = @transform_0, window_bounds = array<i64: 16, 72>}, {pipeline_mode = #tpu.pipeline_mode<synchronous>, transform_indices = @transform_1, window_bounds = array<i64: 16, 72>}]} {
    %c0 = arith.constant 0 : index
    %c0_0 = arith.constant 0 : index
    %0 = vector.load %arg1[%c0, %c0_0] : memref<16x72xf32, #tpu.memory_space<vmem>>, vector<16x72xf32>
    %cst = arith.constant dense<0.000000e+00> : vector<16xf32>
    %1 = vector.multi_reduction <add>, %0, %cst [1] : vector<16x72xf32> to vector<16xf32>
    %2 = vector.shape_cast %1 : vector<16xf32> to vector<16x1xf32>
    %cst_1 = arith.constant 0.013888889 : f32
    %3 = vector.broadcast %cst_1 : f32 to vector<16x1xf32>
    %4 = arith.mulf %2, %3 : vector<16x1xf32>
    %5 = arith.mulf %0, %0 : vector<16x72xf32>
    %cst_2 = arith.constant dense<0.000000e+00> : vector<16xf32>
    %6 = vector.multi_reduction <add>, %5, %cst_2 [1] : vector<16x72xf32> to vector<16xf32>
    %7 = vector.shape_cast %6 : vector<16xf32> to vector<16x1xf32>
    %cst_3 = arith.constant 0.013888889 : f32
    %8 = vector.broadcast %cst_3 : f32 to vector<16x1xf32>
    %9 = arith.mulf %7, %8 : vector<16x1xf32>
    %10 = arith.mulf %4, %4 : vector<16x1xf32>
    %11 = arith.subf %9, %10 : vector<16x1xf32>
    %12 = vector.broadcast %4 : vector<16x1xf32> to vector<16x72xf32>
    %13 = arith.subf %0, %12 : vector<16x72xf32>
    %cst_4 = arith.constant 9.99999974E-6 : f32
    %14 = vector.broadcast %cst_4 : f32 to vector<16x1xf32>
    %15 = arith.addf %11, %14 : vector<16x1xf32>
    %16 = math.rsqrt %15 : vector<16x1xf32>
    %17 = vector.broadcast %16 : vector<16x1xf32> to vector<16x72xf32>
    %18 = arith.mulf %13, %17 : vector<16x72xf32>
    %c0_5 = arith.constant 0 : index
    %c0_6 = arith.constant 0 : index
    %19 = vector.load %arg2[%c0_5, %c0_6] : memref<16x72xf32, #tpu.memory_space<vmem>>, vector<16x72xf32>
    tpu.vector_store %arg2[%c0_5, %c0_6], %18 {strides = array<i32>} : memref<16x72xf32, #tpu.memory_space<vmem>>, vector<16x72xf32>,
    return
  }
  func.func @transform_0(%arg0: i32) -> (i32, i32) {
    %c0_i32 = arith.constant 0 : i32
    %c0_i32_0 = arith.constant 0 : i32
    %c0_i32_1 = arith.constant 0 : i32
    return %c0_i32, %c0_i32_0 : i32, i32
  }
  func.func @transform_1(%arg0: i32) -> (i32, i32) {
    %c0_i32 = arith.constant 0 : i32
    %c0_i32_0 = arith.constant 0 : i32
    %c0_i32_1 = arith.constant 0 : i32
    return %c0_i32, %c0_i32_0 : i32, i32
  }
}

</mosaic_0001>

<llo_original>
// kernel: tpu_custom_call.1
$region0: #{tpu_custom_call.1}
  #allocation0 [shape = 'u32[]', space=smem, size = 0x4, offset = 0x4, fixed_abs, tag = 'smem constant byte address 0x4 - core index']
  #allocation1 [shape = 'u32[144,128]{1,0:T(1,128)}', space=vmem, size = 0x12000, scoped, tag = 'internal scratch']
  %s0 = inlined_call_operand.hbm [shape: f32[16,72], index: 0, kind: input, shape index: {}]
  %s1 = inlined_call_operand.hbm [shape: f32[16,72], index: 1, kind: output, shape index: {}]
  %s2 = sld [smem:[#allocation0]]
  $region18: #{tpu_custom_call.1} parent=0
    _
  %s4 = ssub.s32 1, %s2
  %s5 = scalar_select 0, %s4, %s2
  $region1: #{tpu_custom_call.1} parent=0
    #allocation2 [shape = 'u8[8192]{0}', space=vmem, size = 0x2000, scoped, tag = 'input window, operand 0, single buffered']
    #allocation3 [shape = 's32[1]{0}', space=sflag, size = 0x4, scoped, tag = 'scoped memory for tpu_custom_call.1']
    #allocation4 [shape = 's32[1]{0}', space=sflag, size = 0x4, scoped, tag = 'scoped memory for tpu_custom_call.1']
    #allocation5 [shape = 'u8[8192]{0}', space=vmem, size = 0x2000, scoped, tag = 'output window, operand 0, single buffered']
    %6 = vsyncpa [#allocation3], 0
    %7 = vsyncpa [#allocation4], 0
    // Predicated region
    $region2: #{tpu_custom_call.1} parent=1 // pred_check
      _
    $region3: #{tpu_custom_call.1} parent=1 // pred_check_branch
      %9 = sbr.rel (0) target = $region5
    $region4: #{tpu_custom_call.1} parent=1 // pred_region
      %s11 = ssub.s32 256, 256
      %12 = vsyncadd [#allocation3], %s11
      %s13 = sshll.u32 [#allocation2], 4
      %s14 = int_to_ptr.vmem [resolvable:$true] %s13
      %19 = dma.hbm_to_vmem [thread:$0]  %s0, 256, %s14, [#allocation3], 128, 128, 8
    $region5: #{tpu_custom_call.1} parent=1 // pred_fallthru
      _
    // Predicated region
    $region6: #{tpu_custom_call.1} parent=1 // pred_check
      _
    $region7: #{tpu_custom_call.1} parent=1 // pred_check_branch
      %21 = sbr.rel (0) target = $region9
    $region8: #{tpu_custom_call.1} parent=1 // pred_region
      %22 = dma.done [#allocation3], 256
    $region9: #{tpu_custom_call.1} parent=1 // pred_fallthru
      _
    %v23 = vld [vmem:[#allocation2] sm:$0xff]
    %v24 = vld [vmem:[#allocation2 + $0x8] sm:$0xff]
    %vm25 = vcmask 588800
    %v26 = vsel %vm25, %v23, 0.0
    %27 = vadd.xlane.f32.xlu0 %v26
    %v28 = vpop.xlane.xlu0 %27
    %v29 = vsel %vm25, %v24, 0.0
    %30 = vadd.xlane.f32.xlu0 %v29
    %v31 = vpop.xlane.xlu0 %30
    %v32 = vmul.f32 %v28, 0.013888889
    %v33 = vmul.f32 %v31, 0.013888889
    %v34 = vmul.f32 %v23, %v23
    %v35 = vmul.f32 %v24, %v24
    %v36 = vsel %vm25, %v34, 0.0
    %37 = vadd.xlane.f32.xlu0 %v36
    %v38 = vpop.xlane.xlu0 %37
    %v39 = vsel %vm25, %v35, 0.0
    %40 = vadd.xlane.f32.xlu0 %v39
    %v41 = vpop.xlane.xlu0 %40
    %v42 = vmul.f32 %v38, 0.013888889
    %v43 = vmul.f32 %v41, 0.013888889
    %v44 = vmul.f32 %v32, %v32
    %v45 = vmul.f32 %v33, %v33
    %v46 = vsub.f32 %v42, %v44
    %v47 = vsub.f32 %v43, %v45
    %v48 = vsub.f32 %v23, %v32
    %v49 = vsub.f32 %v24, %v33
    %v50 = vadd.f32 %v46, 1e-05
    %v51 = vadd.f32 %v47, 1e-05
    %v52 = vrsqrt.pop %v50
    %v53 = vrsqrt.pop %v51
    %v54 = vmul.f32 %v48, %v52
    %v55 = vmul.f32 %v49, %v53
    %56 = vst.msk [vmem:[#allocation5] sm:$0xff] %vm25, %v54
    %57 = vst.msk [vmem:[#allocation5 + $0x8] sm:$0xff] %vm25, %v55
    // Predicated region
    $region10: #{tpu_custom_call.1} parent=1 // pred_check
      _
    $region11: #{tpu_custom_call.1} parent=1 // pred_check_branch
      %59 = sbr.rel (0) target = $region13
    $region12: #{tpu_custom_call.1} parent=1 // pred_region
      %s61 = ssub.s32 256, 256
      %62 = vsyncadd [#allocation4], %s61
      %s63 = sshll.u32 [#allocation5], 4
      %s64 = int_to_ptr.vmem [resolvable:$true] %s63
      %69 = dma.vmem_to_hbm [thread:$0]  %s64, 256, %s1, [#allocation4], 128, 128, 8
    $region13: #{tpu_custom_call.1} parent=1 // pred_fallthru
      _
    // Predicated region
    $region14: #{tpu_custom_call.1} parent=1 // pred_check
      _
    $region15: #{tpu_custom_call.1} parent=1 // pred_check_branch
      %71 = sbr.rel (0) target = $region17
    $region16: #{tpu_custom_call.1} parent=1 // pred_region
      %72 = dma.done [#allocation4], 256
    $region17: #{tpu_custom_call.1} parent=1 // pred_fallthru
      _
    %73 = vsyncpa [#allocation3], 1
    %74 = vsyncpa [#allocation4], 1

</llo_original>
